<compile_context>
chip_gen: v5e
topology: v5e:2x2
jax: 0.10.0
libtpu: 0.0.40
codegen_flags: <defaults>
</compile_context>

<pallas_src>
import functools

import jax
import jax.numpy as jnp
from jax.experimental import pallas as pl
from jax.experimental.pallas import tpu as pltpu


def _round_up(x, m):
    return ((x + m - 1) // m) * m


# --------------------------------------------------------------------------
# One-time probe: does pipeline_mode=pl.Buffered(1) lower on this install?
# --------------------------------------------------------------------------
_SINGLE_BUFFER_OK = None


def _single_buffer_supported():
    global _SINGLE_BUFFER_OK
    if _SINGLE_BUFFER_OK is not None:
        return _SINGLE_BUFFER_OK
    try:
        def _k(w_ref, o_ref):
            o_ref[...] = w_ref[...] * 2.0

        spec = pl.BlockSpec((8, 128), lambda i: (0, 0),
                            pipeline_mode=pl.Buffered(1))
        f = pl.pallas_call(
            _k,
            out_shape=jax.ShapeDtypeStruct((8, 128), jnp.float32),
            grid_spec=pltpu.PrefetchScalarGridSpec(
                num_scalar_prefetch=0,
                grid=(1,),
                in_specs=[spec],
                out_specs=pl.BlockSpec((8, 128), lambda i: (0, 0))),
        )
        jax.block_until_ready(f(jnp.ones((8, 128), jnp.float32)))
        _SINGLE_BUFFER_OK = True
    except Exception:
        _SINGLE_BUFFER_OK = False
    return _SINGLE_BUFFER_OK


def _const_spec(shape, single_buffer):
    """BlockSpec for a grid-invariant operand (constant index map)."""
    idx = lambda b, s: tuple(0 for _ in shape)
    if single_buffer:
        return pl.BlockSpec(shape, idx, pipeline_mode=pl.Buffered(1))
    return pl.BlockSpec(shape, idx)


# --------------------------------------------------------------------------
# Fused projection + 2-class gate kernel
# --------------------------------------------------------------------------
def mprag_head_kernel(x_ref, wp_ref, bp_ref, gv_ref, gc_ref, gated_ref):
    # x_ref     : (TILE_S, H)  retriever hidden states tile (batch dim squeezed), f32
    # wp_ref    : (H, H)       projection weight, pre-transposed (in, out), MXU dtype
    # bp_ref    : (1, H)       projection bias (f32)
    # gv_ref    : (1, H)       gate vector   wp_t @ (wc1 - wc0)             (f32)
    # gc_ref    : (1, 1)       gate constant bp.(wc1-wc0) + (bc1-bc0)       (f32)
    # gated_ref : (TILE_S, H)  gated embeddings output
    x = x_ref[...]

    # mask = softmax(logits, -1).argmax(-1) over 2 classes
    #   == 1  iff  l1 > l0  iff  x.(wp_t@dw) + bp.dw + db > 0
    # Computed from x (not proj) so the VPU/XLU work is independent of the MXU
    # result and overlaps with the matmul.  Kept f32 regardless of MXU dtype.
    gate_logit = jnp.sum(x * gv_ref[...], axis=-1, keepdims=True) + gc_ref[...]
    gate = (gate_logit > 0.0).astype(jnp.float32)     # ties -> class 0 (torch.argmax)

    # input_embeds = self.projection(out): cast to the MXU feed dtype in-kernel
    # (no extra HBM pass), accumulate in f32.
    xm = x.astype(wp_ref.dtype)
    proj = jnp.dot(xm, wp_ref[...],
                   preferred_element_type=jnp.float32) + bp_ref[...]   # (TILE_S, H)

    # out = input_embeds * (mask == 1).float()
    gated_ref[...] = (proj * gate).astype(gated_ref.dtype)


def mprag_head(out, wp_t, bp_2d, gv_2d, gc_11, *, tile_s=512,
               mxu_dtype=jnp.bfloat16, out_dtype=None,
               vmem_budget_bytes=48 << 20):
    """Fused projection + 2-class gate.  Returns gated embeddings (B, S, H)."""
    B, S, H = out.shape
    out_dtype = out.dtype if out_dtype is None else out_dtype
    wp_dtype = out.dtype if mxu_dtype is None else mxu_dtype
    # Small weight cast/transpose stays in the wrapper (hoist further upstream
    # if params are static across calls); activations are NOT cast here.
    wp_t = wp_t.astype(wp_dtype)

    x_bytes = jnp.dtype(out.dtype).itemsize
    o_bytes = jnp.dtype(out_dtype).itemsize
    w_bytes = jnp.dtype(wp_dtype).itemsize

    single_buf = _single_buffer_supported()
    w_bufs = 1 if single_buf else 2

    def vmem_need(ts):
        return (H * H * w_bytes * w_bufs                 # resident projection weight
                + 2 * ts * H * (x_bytes + o_bytes)       # double-buffered act/out tiles
                + 4 * (H + 1) * 4 * 2)                   # biases / gate vector (tiny)

    # S tile: as large as the VMEM budget allows, sublane aligned (16 when any
    # bf16 tile is in play), never larger than S (ragged edge handled by grid).
    align = 16 if (S >= 16 and (wp_dtype == jnp.bfloat16
                                or out_dtype == jnp.bfloat16)) else 8
    ts = max(min(tile_s, S), 1)
    if ts >= align:
        ts = (ts // align) * align
    while ts > align and vmem_need(ts) > vmem_budget_bytes:
        ts = max((ts // 2 // align) * align, align)

    vmem_limit = int(min(max(vmem_need(ts) + (8 << 20), 32 << 20), 64 << 20))

    grid = (B, pl.cdiv(S, ts))   # no jnp.pad / slice: pipeliner masks the edge block

    kernel = pl.pallas_call(
        mprag_head_kernel,
        out_shape=jax.ShapeDtypeStruct((B, S, H), out_dtype),
        grid_spec=pltpu.PrefetchScalarGridSpec(
            num_scalar_prefetch=0,
            grid=grid,
            in_specs=[
                pl.BlockSpec((pl.Squeezed(), ts, H), lambda b, s: (b, s, 0)),
                _const_spec((H, H), single_buf),
                _const_spec((1, H), single_buf),
                _const_spec((1, H), single_buf),
                _const_spec((1, 1), single_buf),
            ],
            out_specs=pl.BlockSpec((pl.Squeezed(), ts, H),
                                   lambda b, s: (b, s, 0))),
        compiler_params=pltpu.CompilerParams(
            dimension_semantics=("parallel", "parallel"),
            vmem_limit_bytes=vmem_limit),
    )
    return kernel(out, wp_t, bp_2d, gv_2d, gc_11)


def mprag_forward(input_sequence, out, attention_mask, wp, bp, wc, bc,
                  *, tile_s=512, mxu_dtype=jnp.bfloat16, out_dtype=None):
    """Glue around the fused kernel, mirroring MPRAG.forward.

    input_sequence : (B, S_prefix, H)  retriever prefix embeddings
    out            : (B, S, H)         retriever hidden states
    attention_mask : (B, S_prefix)
    wp, bp         : projection Linear(H, H) params, torch layout (out, in)
    wc, bc         : classifier token-classification head (2, H), (2,)
    """
    B, S, H = out.shape

    # Tiny per-call weight prep (all O(H^2) or smaller, f32).
    wp_t = wp.T                                               # (H_in, H_out)
    dw = (wc[1] - wc[0]).astype(jnp.float32)                  # (H,)
    # Gate folded back to x:  l1 - l0 = x.(wp_t @ dw) + bp.dw + (bc1 - bc0)
    gv = (wp_t.astype(jnp.float32) @ dw[:, None]).reshape(1, H)
    gc = (jnp.sum(bp.astype(jnp.float32) * dw)
          + (bc[1] - bc[0]).astype(jnp.float32)).reshape(1, 1)

    gated = mprag_head(out, wp_t, bp.reshape(1, H).astype(jnp.float32),
                       gv, gc, tile_s=tile_s, mxu_dtype=mxu_dtype,
                       out_dtype=out_dtype)

    # gen_input_embeds = torch.cat([input_sequence, out[:, 1:]], dim=1)
    # TODO(synk): fusing this write into the kernel out_specs needs a
    # pl.Element row offset of (S_prefix - 1), which is generally not
    # 8-sublane aligned; kept as one plain concat pass for robustness.
    gen_input_embeds = jnp.concatenate([input_sequence, gated[:, 1:]], axis=1)

    # new_attention_mask = ones(...); [:, :existing.shape[1]] = existing
    Lg = gen_input_embeds.shape[1]
    new_attention_mask = jnp.ones((B, Lg), dtype=jnp.int32)
    new_attention_mask = new_attention_mask.at[:, :attention_mask.shape[1]].set(
        attention_mask.astype(jnp.int32))

    # TODO(synk): the retriever (BERT), the classifier's BERT encoder, and the
    # generator (facebook/bart-base seq2seq with labels/loss) are pretrained
    # models with no clean Pallas equivalent; we return the fused generator
    # inputs (embeds + attention mask) instead of the generator loss.
    return gen_input_embeds, new_attention_mask


if __name__ == "__main__":
    B, S, H = 2, 8, 32         # batch, sequence, hidden_size
    S_PREFIX = 8               # length of retriever's input_sequence embeddings

    key = jax.random.PRNGKey(0)
    k1, k2, k3, k4, k5, k6 = jax.random.split(key, 6)

    # "retriever" outputs (synthetic)
    input_sequence = jax.random.normal(k1, (B, S_PREFIX, H), dtype=jnp.float32)
    out_hidden = jax.random.normal(k2, (B, S, H), dtype=jnp.float32)
    attention_mask = jnp.ones((B, S_PREFIX), dtype=jnp.int32)

    # deterministic parameters (nn.Linear(H, H) and classifier head H->2)
    wp = 0.05 * jax.random.normal(k3, (H, H), dtype=jnp.float32)   # (out, in)
    bp = 0.01 * jax.random.normal(k4, (H,), dtype=jnp.float32)
    wc = 0.05 * jax.random.normal(k5, (2, H), dtype=jnp.float32)   # (out, in)
    bc = 0.01 * jax.random.normal(k6, (2,), dtype=jnp.float32)

    # ---- f32 MXU feed: tight check against the torch-equivalent reference ----
    fwd_f32 = jax.jit(functools.partial(mprag_forward, mxu_dtype=None))
    gen_embeds, new_mask = fwd_f32(input_sequence, out_hidden, attention_mask,
                                   wp, bp, wc, bc)
    jax.block_until_ready(gen_embeds)

    # pure-JAX reference (mirrors the torch forward exactly)
    proj_ref = jnp.einsum("bsh,oh->bso", out_hidden, wp) + bp
    logits_ref = jnp.einsum("bsh,oh->bso", proj_ref, wc) + bc
    mask_ref = jnp.argmax(jax.nn.softmax(logits_ref, axis=-1), axis=-1)
    gated_ref = proj_ref * (mask_ref == 1).astype(jnp.float32)[..., None]
    gen_ref = jnp.concatenate([input_sequence, gated_ref[:, 1:]], axis=1)

    assert gen_embeds.shape == gen_ref.shape
    assert jnp.allclose(gen_embeds, gen_ref, atol=1e-4, rtol=1e-4)
    assert new_mask.shape == (B, S_PREFIX + S - 1)
    assert bool(jnp.all(new_mask[:, :S_PREFIX] == attention_mask))
    assert bool(jnp.all(new_mask[:, S_PREFIX:] == 1))

    # ---- default bf16 MXU feed + bf16 writeback (v5e/v6e/v7x production path) ----
    fwd_bf16 = jax.jit(functools.partial(mprag_forward, out_dtype=jnp.bfloat16))
    gen_bf16, mask_bf16 = fwd_bf16(input_sequence, out_hidden, attention_mask,
                                   wp, bp, wc, bc)
    jax.block_until_ready(gen_bf16)
    assert gen_bf16.shape == gen_ref.shape
    assert jnp.allclose(gen_bf16.astype(jnp.float32), gen_ref,
                        atol=5e-2, rtol=5e-2)
    assert bool(jnp.all(mask_bf16 == new_mask))

    print("KERNEL_OK")
</pallas_src>

<mosaic_0001>
module attributes {stable_mosaic.version = 11 : i64} {
  func.func @mprag_head_kernel(%arg0: i32, %arg1: i32, %arg2: memref<1x8x32xf32, #tpu.memory_space<vmem>>, %arg3: memref<32x32xf32, #tpu.memory_space<vmem>>, %arg4: memref<1x32xf32, #tpu.memory_space<vmem>>, %arg5: memref<1x32xf32, #tpu.memory_space<vmem>>, %arg6: memref<1x1xf32, #tpu.memory_space<vmem>>, %arg7: memref<1x8x32xf32, #tpu.memory_space<vmem>>) attributes {dimension_semantics = [#tpu.dimension_semantics<parallel>, #tpu.dimension_semantics<parallel>], iteration_bounds = array<i64: 2, 1>, scalar_prefetch = 0 : i64, scratch_operands = 0 : i64, tpu.core_type = #tpu.core_type<tc>, window_params = [{transform_indices = @transform_0, window_bounds = array<i64: 1, 8, 32>}, {pipeline_mode = #tpu.pipeline_mode<synchronous>, transform_indices = @transform_1, window_bounds = array<i64: 32, 32>}, {pipeline_mode = #tpu.pipeline_mode<synchronous>, transform_indices = @transform_2, window_bounds = array<i64: 1, 32>}, {pipeline_mode = #tpu.pipeline_mode<synchronous>, transform_indices = @transform_3, window_bounds = array<i64: 1, 32>}, {pipeline_mode = #tpu.pipeline_mode<synchronous>, transform_indices = @transform_4, window_bounds = array<i64: 1, 1>}, {transform_indices = @transform_5, window_bounds = array<i64: 1, 8, 32>}]} {
    %c0 = arith.constant 0 : index
    %c0_0 = arith.constant 0 : index
    %c0_1 = arith.constant 0 : index
    %0 = vector.load %arg2[%c0, %c0_0, %c0_1] : memref<1x8x32xf32, #tpu.memory_space<vmem>>, vector<1x8x32xf32>
    %1 = vector.shape_cast %0 : vector<1x8x32xf32> to vector<8x32xf32>
    %c0_2 = arith.constant 0 : index
    %c0_3 = arith.constant 0 : index
    %2 = vector.load %arg5[%c0_2, %c0_3] : memref<1x32xf32, #tpu.memory_space<vmem>>, vector<1x32xf32>
    %3 = vector.broadcast %2 : vector<1x32xf32> to vector<8x32xf32>
    %4 = arith.mulf %1, %3 : vector<8x32xf32>
    %cst = arith.constant dense<0.000000e+00> : vector<8xf32>
    %5 = vector.multi_reduction <add>, %4, %cst [1] : vector<8x32xf32> to vector<8xf32>
    %6 = vector.shape_cast %5 : vector<8xf32> to vector<8x1xf32>
    %c0_4 = arith.constant 0 : index
    %c0_5 = arith.constant 0 : index
    %7 = vector.load %arg6[%c0_4, %c0_5] : memref<1x1xf32, #tpu.memory_space<vmem>>, vector<1x1xf32>
    %8 = vector.broadcast %7 : vector<1x1xf32> to vector<8x1xf32>
    %9 = arith.addf %6, %8 : vector<8x1xf32>
    %cst_6 = arith.constant 0.000000e+00 : f32
    %10 = vector.broadcast %cst_6 : f32 to vector<8x1xf32>
    %11 = arith.cmpf ogt, %9, %10 : vector<8x1xf32>
    %12 = arith.extui %11 : vector<8x1xi1> to vector<8x1xi32>
    %13 = arith.sitofp %12 : vector<8x1xi32> to vector<8x1xf32>
    %c0_7 = arith.constant 0 : index
    %c0_8 = arith.constant 0 : index
    %14 = vector.load %arg3[%c0_7, %c0_8] : memref<32x32xf32, #tpu.memory_space<vmem>>, vector<32x32xf32>
    %cst_9 = arith.constant dense<0.000000e+00> : vector<8x32xf32>
    %15 = tpu.matmul %1, %14, %cst_9 {dimension_numbers = #tpu.dot_dimension_numbers<[1], [0], [0], [1], [0, 0, 1, 1], [], []>} : vector<8x32xf32>, vector<32x32xf32>, vector<8x32xf32> -> vector<8x32xf32>
    %c0_10 = arith.constant 0 : index
    %c0_11 = arith.constant 0 : index
    %16 = vector.load %arg4[%c0_10, %c0_11] : memref<1x32xf32, #tpu.memory_space<vmem>>, vector<1x32xf32>
    %17 = vector.broadcast %16 : vector<1x32xf32> to vector<8x32xf32>
    %18 = arith.addf %15, %17 : vector<8x32xf32>
    %19 = vector.broadcast %13 : vector<8x1xf32> to vector<8x32xf32>
    %20 = arith.mulf %18, %19 : vector<8x32xf32>
    %c0_12 = arith.constant 0 : index
    %c0_13 = arith.constant 0 : index
    %c0_14 = arith.constant 0 : index
    %21 = vector.load %arg7[%c0_12, %c0_13, %c0_14] : memref<1x8x32xf32, #tpu.memory_space<vmem>>, vector<1x8x32xf32>
    %22 = vector.shape_cast %21 : vector<1x8x32xf32> to vector<8x32xf32>
    %23 = vector.shape_cast %20 : vector<8x32xf32> to vector<1x8x32xf32>
    tpu.vector_store %arg7[%c0_12, %c0_13, %c0_14], %23 {strides = array<i32>} : memref<1x8x32xf32, #tpu.memory_space<vmem>>, vector<1x8x32xf32>,
    return
  }
  func.func @transform_0(%arg0: i32, %arg1: i32) -> (i32, i32, i32) {
    %c0_i32 = arith.constant 0 : i32
    %c0_i32_0 = arith.constant 0 : i32
    return %arg0, %arg1, %c0_i32 : i32, i32, i32
  }
  func.func @transform_1(%arg0: i32, %arg1: i32) -> (i32, i32) {
    %c0_i32 = arith.constant 0 : i32
    %c0_i32_0 = arith.constant 0 : i32
    %c0_i32_1 = arith.constant 0 : i32
    return %c0_i32, %c0_i32_0 : i32, i32
  }
  func.func @transform_2(%arg0: i32, %arg1: i32) -> (i32, i32) {
    %c0_i32 = arith.constant 0 : i32
    %c0_i32_0 = arith.constant 0 : i32
    %c0_i32_1 = arith.constant 0 : i32
    return %c0_i32, %c0_i32_0 : i32, i32
  }
  func.func @transform_3(%arg0: i32, %arg1: i32) -> (i32, i32) {
    %c0_i32 = arith.constant 0 : i32
    %c0_i32_0 = arith.constant 0 : i32
    %c0_i32_1 = arith.constant 0 : i32
    return %c0_i32, %c0_i32_0 : i32, i32
  }
  func.func @transform_4(%arg0: i32, %arg1: i32) -> (i32, i32) {
    %c0_i32 = arith.constant 0 : i32
    %c0_i32_0 = arith.constant 0 : i32
    %c0_i32_1 = arith.constant 0 : i32
    return %c0_i32, %c0_i32_0 : i32, i32
  }
  func.func @transform_5(%arg0: i32, %arg1: i32) -> (i32, i32, i32) {
    %c0_i32 = arith.constant 0 : i32
    %c0_i32_0 = arith.constant 0 : i32
    return %arg0, %arg1, %c0_i32 : i32, i32, i32
  }
}

</mosaic_0001>

<llo_original>
// kernel: mprag_forward.1
$region0: #{mprag_forward.1}
  #allocation0 [shape = 'u32[]', space=smem, size = 0x4, offset = 0x4, fixed_abs, tag = 'smem constant byte address 0x4 - core index']
  #allocation1 [shape = 'u32[72,128]{1,0:T(1,128)}', space=vmem, size = 0x9000, scoped, tag = 'internal scratch']
  #allocation2 [shape = 'f32[1,1]{1,0:T(1,128)S(1)}', space=vmem, size = 0x200, scoped, tag = 'scoped memory for mprag_forward.1']
  %s0 = inlined_call_operand.vmem [shape: f32[2,8,32], index: 0, kind: input, shape index: {}]
  %s1 = inlined_call_operand.vmem [shape: f32[32,32], index: 1, kind: input, shape index: {}]
  %s2 = inlined_call_operand.vmem [shape: f32[1,32], index: 2, kind: input, shape index: {}]
  %s3 = inlined_call_operand.vmem [shape: f32[1,32], index: 3, kind: input, shape index: {}]
  %s4 = inlined_call_operand.<no memory space> [shape: f32[1,1], index: 4, kind: input, shape index: {}]
  %s5 = inlined_call_operand.vmem [shape: f32[2,8,32], index: 5, kind: output, shape index: {}]
  %s6 = sld [smem:[#allocation0]]
  $region53: #{mprag_forward.1} parent=0
    _
  %s8 = ssub.s32 1, %s6
  %s9 = scalar_select 0, %s8, %s6
  %v10 = vstv %s4
  %11 = vst [vmem:[#allocation2] sm:$0x1] %v10
  loop: start=0, step=1, limit=4
  $region2: #{mprag_forward.1} parent=0 // loop_pre_header
    _
  $region3: #{mprag_forward.1} parent=0 // loop_header
    %s13 = sphi 0, %s17
    %p14 = scmp.ge.s32.totalorder %s13, 4
    %s20 = sphi 0, %s32
    %s21 = sphi 0, %s28
    %s22 = sphi 0, %s20
    %s23 = sphi 0, %s21
    %s24 = sphi 0, %s22
    %s25 = sphi 0, %s23
    %s37 = sphi 0, %s39
    %s40 = sphi 0, %s37
    %s41 = sphi 0, %s40
    %s57 = sphi 0, %s41
    %s61 = sphi 0, %s61
    %s63 = sphi 0, %s61
    %s64 = sphi 0, %s63
    %s78 = sphi 0, %s64
    %s82 = sphi 0, %s82
    %s84 = sphi 0, %s82
    %s85 = sphi 0, %s84
    %s99 = sphi 0, %s85
    %s103 = sphi 0, %s103
    %s105 = sphi 0, %s103
    %s106 = sphi 0, %s105
    %s120 = sphi 0, %s106
    %s124 = sphi 0, %s124
    %s126 = sphi 0, %s124
    %s127 = sphi 0, %s126
    %s141 = sphi 0, %s127
    %s149 = sphi 0, %s151
    %s152 = sphi 0, %s149
    %s153 = sphi 0, %s152
    %s169 = sphi 0, %s153
  $region4: #{mprag_forward.1} parent=0 // loop_header_branch
    %16 = sbr.rel (%p14) target = $region8
  $region5: #{mprag_forward.1} parent=0 // loop_body
    %s18 = ssub.s32 %s13, 1
    %s19 = ssub.s32 %s13, 2
    %s26 = sadd.s32 1, %s21
    %p27 = scmp.ge.s32.totalorder %s26, 1
    %s28 = scalar_select %p27, 0, %s26
    %s29 = sadd.s32 1, %s20
    %s30 = scalar_select %p27, %s29, %s20
    %p31 = scmp.ge.s32.totalorder %s30, 2
    %s32 = scalar_select %p31, 0, %s30
    %s33 = ssub.s32 %s20, %s32
    %s34 = ssub.s32 %s21, %s28
    %s35 = sor.u32 %s33, %s34
    %p36 = scmp.eq.s32.totalorder %s35, 0
    %s38 = sadd.s32 %s37, 1
    %s39 = scalar_select %p36, %s37, %s38
    %p42 = pneg %p36
    %p43 = scmp.eq.s32.totalorder %s13, 1
    %p44 = por %p42, %p43
    %p45 = scmp.ne.s32.totalorder %s37, %s40
    %p46 = scmp.eq.s32.totalorder %s13, 0
    %p47 = por %p45, %p46
    %p48 = scmp.ne.s32.totalorder %s37, %s40
    %p49 = scmp.eq.s32.totalorder %s18, 1
    %p50 = por %p48, %p49
    %p51 = scmp.ne.s32.totalorder %s40, %s41
    %p52 = scmp.eq.s32.totalorder %s18, 0
    %p53 = por %p51, %p52
    %p54 = scmp.ne.s32.totalorder %s40, %s41
    %p55 = scmp.eq.s32.totalorder %s19, 1
    %p56 = por %p54, %p55
    %p58 = scmp.ne.s32.totalorder %s41, %s57
    %p59 = scmp.eq.s32.totalorder %s19, 0
    %p60 = por %p58, %p59
    %s62 = sadd.s32 %s61, 1
    %p65 = scmp.eq.s32.totalorder %s13, 1
    %p66 = scmp.ne.s32.totalorder %s61, %s63
    %p67 = scmp.eq.s32.totalorder %s13, 0
    %p68 = por %p66, %p67
    %p69 = scmp.ne.s32.totalorder %s61, %s63
    %p70 = scmp.eq.s32.totalorder %s18, 1
    %p71 = por %p69, %p70
    %p72 = scmp.ne.s32.totalorder %s63, %s64
    %p73 = scmp.eq.s32.totalorder %s18, 0
    %p74 = por %p72, %p73
    %p75 = scmp.ne.s32.totalorder %s63, %s64
    %p76 = scmp.eq.s32.totalorder %s19, 1
    %p77 = por %p75, %p76
    %p79 = scmp.ne.s32.totalorder %s64, %s78
    %p80 = scmp.eq.s32.totalorder %s19, 0
    %p81 = por %p79, %p80
    %s83 = sadd.s32 %s82, 1
    %p86 = scmp.eq.s32.totalorder %s13, 1
    %p87 = scmp.ne.s32.totalorder %s82, %s84
    %p88 = scmp.eq.s32.totalorder %s13, 0
    %p89 = por %p87, %p88
    %p90 = scmp.ne.s32.totalorder %s82, %s84
    %p91 = scmp.eq.s32.totalorder %s18, 1
    %p92 = por %p90, %p91
    %p93 = scmp.ne.s32.totalorder %s84, %s85
    %p94 = scmp.eq.s32.totalorder %s18, 0
    %p95 = por %p93, %p94
    %p96 = scmp.ne.s32.totalorder %s84, %s85
    %p97 = scmp.eq.s32.totalorder %s19, 1
    %p98 = por %p96, %p97
    %p100 = scmp.ne.s32.totalorder %s85, %s99
    %p101 = scmp.eq.s32.totalorder %s19, 0
    %p102 = por %p100, %p101
    %s104 = sadd.s32 %s103, 1
    %p107 = scmp.eq.s32.totalorder %s13, 1
    %p108 = scmp.ne.s32.totalorder %s103, %s105
    %p109 = scmp.eq.s32.totalorder %s13, 0
    %p110 = por %p108, %p109
    %p111 = scmp.ne.s32.totalorder %s103, %s105
    %p112 = scmp.eq.s32.totalorder %s18, 1
    %p113 = por %p111, %p112
    %p114 = scmp.ne.s32.totalorder %s105, %s106
    %p115 = scmp.eq.s32.totalorder %s18, 0
    %p116 = por %p114, %p115
    %p117 = scmp.ne.s32.totalorder %s105, %s106
    %p118 = scmp.eq.s32.totalorder %s19, 1
    %p119 = por %p117, %p118
    %p121 = scmp.ne.s32.totalorder %s106, %s120
    %p122 = scmp.eq.s32.totalorder %s19, 0
    %p123 = por %p121, %p122
    %s125 = sadd.s32 %s124, 1
    %p128 = scmp.eq.s32.totalorder %s13, 1
    %p129 = scmp.ne.s32.totalorder %s124, %s126
    %p130 = scmp.eq.s32.totalorder %s13, 0
    %p131 = por %p129, %p130
    %p132 = scmp.ne.s32.totalorder %s124, %s126
    %p133 = scmp.eq.s32.totalorder %s18, 1
    %p134 = por %p132, %p133
    %p135 = scmp.ne.s32.totalorder %s126, %s127
    %p136 = scmp.eq.s32.totalorder %s18, 0
    %p137 = por %p135, %p136
    %p138 = scmp.ne.s32.totalorder %s126, %s127
    %p139 = scmp.eq.s32.totalorder %s19, 1
    %p140 = por %p138, %p139
    %p142 = scmp.ne.s32.totalorder %s127, %s141
    %p143 = scmp.eq.s32.totalorder %s19, 0
    %p144 = por %p142, %p143
    %s145 = ssub.s32 %s20, %s32
    %s146 = ssub.s32 %s21, %s28
    %s147 = sor.u32 %s145, %s146
    %p148 = scmp.eq.s32.totalorder %s147, 0
    %s150 = sadd.s32 %s149, 1
    %s151 = scalar_select %p148, %s149, %s150
    %p154 = pneg %p148
    %p155 = scmp.eq.s32.totalorder %s13, 1
    %p156 = por %p154, %p155
    %p157 = scmp.ne.s32.totalorder %s149, %s152
    %p158 = scmp.eq.s32.totalorder %s13, 0
    %p159 = por %p157, %p158
    %p160 = scmp.ne.s32.totalorder %s149, %s152
    %p161 = scmp.eq.s32.totalorder %s18, 1
    %p162 = por %p160, %p161
    %p163 = scmp.ne.s32.totalorder %s152, %s153
    %p164 = scmp.eq.s32.totalorder %s18, 0
    %p165 = por %p163, %p164
    %p166 = scmp.ne.s32.totalorder %s152, %s153
    %p167 = scmp.eq.s32.totalorder %s19, 1
    %p168 = por %p166, %p167
    %p170 = scmp.ne.s32.totalorder %s153, %s169
    %p171 = scmp.eq.s32.totalorder %s19, 0
    %p172 = por %p170, %p171
    %p173 = scmp.le.s32.totalorder 1, %s13
    %p174 = scmp.lt.s32.totalorder %s13, 3
    %p175 = pnand %p173, %p174
    %p176 = pneg %p175
    // Predicated region
    $region9: #{mprag_forward.1} parent=5 // pred_check
      _
    $region10: #{mprag_forward.1} parent=5 // pred_check_branch
      %178 = sbr.rel (%p175) target = $region12
    $region11: #{mprag_forward.1} parent=5 // pred_region
      %s179 = ssub.s32 %s13, 1
      // Predicated region
      $region13: #{mprag_forward.1} parent=11 // pred_check
        %p180 = pneg %p74
      $region14: #{mprag_forward.1} parent=11 // pred_check_branch
        %182 = sbr.rel (%p180) target = $region16
      $region15: #{mprag_forward.1} parent=11 // pred_region
        _
      $region16: #{mprag_forward.1} parent=11 // pred_fallthru
        _
      // Predicated region
      $region17: #{mprag_forward.1} parent=11 // pred_check
        %p183 = pneg %p95
      $region18: #{mprag_forward.1} parent=11 // pred_check_branch
        %185 = sbr.rel (%p183) target = $region20
      $region19: #{mprag_forward.1} parent=11 // pred_region
        _
      $region20: #{mprag_forward.1} parent=11 // pred_fallthru
        _
      // Predicated region
      $region21: #{mprag_forward.1} parent=11 // pred_check
        %p186 = pneg %p116
      $region22: #{mprag_forward.1} parent=11 // pred_check_branch
        %188 = sbr.rel (%p186) target = $region24
      $region23: #{mprag_forward.1} parent=11 // pred_region
        _
      $region24: #{mprag_forward.1} parent=11 // pred_fallthru
        _
      // Predicated region
      $region25: #{mprag_forward.1} parent=11 // pred_check
        %p189 = pneg %p137
      $region26: #{mprag_forward.1} parent=11 // pred_check_branch
        %191 = sbr.rel (%p189) target = $region28
      $region27: #{mprag_forward.1} parent=11 // pred_region
        _
      $region28: #{mprag_forward.1} parent=11 // pred_fallthru
        _
    $region12: #{mprag_forward.1} parent=5 // pred_fallthru
      _
    %p192 = scmp.lt.s32.totalorder %s13, 2
    // Predicated region
    $region29: #{mprag_forward.1} parent=5 // pred_check
      %p193 = pneg %p192
    $region30: #{mprag_forward.1} parent=5 // pred_check_branch
      %195 = sbr.rel (%p193) target = $region32
    $region31: #{mprag_forward.1} parent=5 // pred_region
      // Predicated region
      $region33: #{mprag_forward.1} parent=31 // pred_check
        %p196 = pneg %p47
      $region34: #{mprag_forward.1} parent=31 // pred_check_branch
        %198 = sbr.rel (%p196) target = $region36
      $region35: #{mprag_forward.1} parent=31 // pred_region
        %p199 = scmp.lt.s32.totalorder %s20, 1
        %s200 = scalar_select %p199, %s20, 1
        %p201 = scmp.lt.s32.totalorder %s21, 0
        %s202 = scalar_select %p201, %s21, 0
        %s203 = sadd.s32 %s202, %s200
        %s204 = smul.addr %s203, 8
        %s205 = scalar_lea.vmem %s0, %s204
      $region36: #{mprag_forward.1} parent=31 // pred_fallthru
        _
    $region32: #{mprag_forward.1} parent=5 // pred_fallthru
      _
    %p206 = scmp.le.s32.totalorder 1, %s13
    %p207 = scmp.lt.s32.totalorder %s13, 3
    %p208 = pnand %p206, %p207
    %p209 = pneg %p208
    // Predicated region
    $region37: #{mprag_forward.1} parent=5 // pred_check
      _
    $region38: #{mprag_forward.1} parent=5 // pred_check_branch
      %211 = sbr.rel (%p208) target = $region40
    $region39: #{mprag_forward.1} parent=5 // pred_region
      %s212 = ssub.s32 %s13, 1
      %p213 = scmp.lt.s32.totalorder %s22, 1
      %s214 = scalar_select %p213, %s22, 1
      %p215 = scmp.lt.s32.totalorder %s23, 0
      %s216 = scalar_select %p215, %s23, 0
      %s217 = sadd.s32 %s216, %s214
      %s218 = smul.addr %s217, 8
      %s219 = scalar_lea.vmem %s0, %s218
      %p220 = pneg %p53
      %p221 = pneg %p50
      %p222 = pneg %p74
      %p223 = pneg %p71
      %p224 = pneg %p95
      %p225 = pneg %p92
      %p226 = pneg %p116
      %p227 = pneg %p113
      %p228 = pneg %p137
      %p229 = pneg %p134
      %p230 = pneg %p165
      %p231 = pneg %p162
      %p232 = scmp.lt.s32.totalorder %s22, 1
      %s233 = scalar_select %p232, %s22, 1
      %p234 = scmp.lt.s32.totalorder %s23, 0
      %s235 = scalar_select %p234, %s23, 0
      %s236 = sadd.s32 %s235, %s233
      %s237 = smul.addr %s236, 8
      %s238 = scalar_lea.vmem %s5, %s237
      %p239 = scmp.lt.s32.totalorder %s22, 1
      %s240 = scalar_select %p239, %s22, 1
      %p241 = scmp.lt.s32.totalorder %s23, 0
      %s242 = scalar_select %p241, %s23, 0
      %s243 = sadd.s32 %s242, %s240
      %s244 = smul.addr %s243, 8
      %s245 = scalar_lea.vmem %s0, %s244
      %p246 = scmp.lt.s32.totalorder %s22, 1
      %s247 = scalar_select %p246, %s22, 1
      %p248 = scmp.lt.s32.totalorder %s23, 0
      %s249 = scalar_select %p248, %s23, 0
      %s250 = sadd.s32 %s249, %s247
      %s251 = smul.addr %s250, 8
      %s252 = scalar_lea.vmem %s5, %s251
      %v253 = vld [vmem:[%s245] sm:$0xff]
      %v254 = vld [vmem:[%s3] sm:$0x1]
      %v256 = vperm.slane %v254, 0
      %v258 = vmul.f32 %v253, %v256
      %vm259 = vcmask 261120
      %v260 = vsel %vm259, %v258, 0.0
      %261 = vadd.xlane.f32.xlu0 %v260
      %v262 = vpop.xlane.xlu0 %261
      %v263 = vld [vmem:[#allocation2] sm:$0x1]
      %v265 = vperm.slane %v263, 0
      %v267 = vadd.f32 %v262, %v265
      %vm268 = vcmp.gt.f32.partialorder %v267, 0.0
      %v269 = vsel %vm268, 1, 0
      %v270 = vcvt.s32.f32 %v269
      %v271 = vld [vmem:[%s1] sm:$0xff]
      %v272 = vld [vmem:[%s1 + $0x8] sm:$0xff]
      %v273 = vld [vmem:[%s1 + $0x10] sm:$0xff]
      %v274 = vld [vmem:[%s1 + $0x18] sm:$0xff]
      %v275 = vld [vmem:[%s2] sm:$0x1]
      %v277 = vperm.slane %v275, 0
      %v280 = vsel %vm259, %v253, 0
      %282 = vmatpush.msra.mxu0 0.0
      %283 = vmatpush.msra.mxu0 0.0
      %284 = vmatpush.msra.mxu0 0.0
      %285 = vmatpush.msra.mxu0 0.0
      %286 = vmatpush.msra.mxu0 0.0
      %287 = vmatpush.msra.mxu0 0.0
      %288 = vmatpush.msra.mxu0 0.0
      %289 = vmatpush.msra.mxu0 0.0
      %290 = vmatpush.msra.mxu0 0.0
      %291 = vmatpush.msra.mxu0 0.0
      %292 = vmatpush.msra.mxu0 0.0
      %293 = vmatpush.msra.mxu0 0.0
      %294 = vmatpush.msra.mxu0 %v274
      %295 = vmatpush.msra.mxu0 %v273
      %296 = vmatpush.msra.mxu0 %v272
      %297 = vmatpush.msra.mxu0 %v271
      %298 = vmatmul.f32.gmra.mxu0 %v280
      %v299 = vpop.f32.mrf.mxu0
      %v300 = vadd.f32 %v277, %v299
      %301 = vdwg.mxu0
      %303 = vset.pattern.permute.xlu0 0
      %304 = vperm.xlu0 %303, %v270
      %v305 = vpop.permute.xlu0 %304
      %v307 = vmul.f32 %v300, %v305
      %308 = vst.msk [vmem:[%s252] sm:$0xff] %vm259, %v307
      %p309 = scmp.lt.s32.totalorder %s22, 1
      %s310 = scalar_select %p309, %s22, 1
      %p311 = scmp.lt.s32.totalorder %s23, 0
      %s312 = scalar_select %p311, %s23, 0
      %s313 = sadd.s32 %s312, %s310
      %s314 = smul.addr %s313, 8
      %s315 = scalar_lea.vmem %s5, %s314
      // Predicated region
      $region41: #{mprag_forward.1} parent=39 // pred_check
        %p316 = pneg %p162
      $region42: #{mprag_forward.1} parent=39 // pred_check_branch
        %318 = sbr.rel (%p316) target = $region44
      $region43: #{mprag_forward.1} parent=39 // pred_region
        _
      $region44: #{mprag_forward.1} parent=39 // pred_fallthru
        _
    $region40: #{mprag_forward.1} parent=5 // pred_fallthru
      _
    %p319 = scmp.le.s32.totalorder 2, %s13
    // Predicated region
    $region45: #{mprag_forward.1} parent=5 // pred_check
      %p320 = pneg %p319
    $region46: #{mprag_forward.1} parent=5 // pred_check_branch
      %322 = sbr.rel (%p320) target = $region48
    $region47: #{mprag_forward.1} parent=5 // pred_region
      %s323 = ssub.s32 %s13, 2
      // Predicated region
      $region49: #{mprag_forward.1} parent=47 // pred_check
        %p324 = pneg %p168
      $region50: #{mprag_forward.1} parent=47 // pred_check_branch
        %326 = sbr.rel (%p324) target = $region52
      $region51: #{mprag_forward.1} parent=47 // pred_region
        %p327 = scmp.lt.s32.totalorder %s24, 1
        %s328 = scalar_select %p327, %s24, 1
        %p329 = scmp.lt.s32.totalorder %s25, 0
        %s330 = scalar_select %p329, %s25, 0
        %s331 = sadd.s32 %s330, %s328
        %s332 = smul.addr %s331, 8
        %s333 = scalar_lea.vmem %s5, %s332
      $region52: #{mprag_forward.1} parent=47 // pred_fallthru
        _
    $region48: #{mprag_forward.1} parent=5 // pred_fallthru
      _
  $region6: #{mprag_forward.1} parent=0 // loop_footer
    %s17 = sadd.s32 1, %s13
  $region7: #{mprag_forward.1} parent=0 // loop_footer_branch
    %12 = sbr.rel target = $region3
  $region8: #{mprag_forward.1} parent=0 // loop_exit
    _

</llo_original>
